<compile_context>
chip_gen: v5e
topology: v5e:2x2
jax: 0.10.0
libtpu: 0.0.40
codegen_flags: <defaults>
</compile_context>

<pallas_src>
import functools

import numpy as np
import jax
import jax.numpy as jnp
from jax.experimental import pallas as pl
from jax.experimental.pallas import tpu as pltpu

_LANE = 128


def _round_up(n, m):
    return ((n + m - 1) // m) * m


def _device_kind():
    try:
        return jax.devices()[0].device_kind.lower()
    except Exception:
        return ""


def _default_batch_tile():
    kind = _device_kind()
    if "v6" in kind:
        return 512     # 128 MiB VMEM; big tiles amortize per-step overhead
    if "v5" in kind:
        return 256     # 16 MiB scoped default / smaller HBM BW
    return 256         # v7x (64 MiB VMEM) and unknown


def _num_parallel_cores():
    # v7x has 2 TensorCores/chip that dimension_semantics=("parallel",) can
    # shard over; the other generations handled here have 1.
    return 2 if "v7" in _device_kind() else 1


def _conv_as_dense(w, bias, H, W, stride, pad):
    """Fold a Conv2d into a dense transfer matrix on flattened-NCHW activations.

    w: (Cout, Cin, kh, kw) numpy f32, bias: (Cout,) numpy f32.
    Returns (T, b_vec, Ho, Wo) with  y_flat = x_flat @ T + b_vec,
    where x_flat / y_flat are per-sample NCHW-flattened activations
    (row index = cin*H*W + h*W + w, col index = cout*Ho*Wo + ho*Wo + wo).
    """
    Cout, Cin, kh, kw = w.shape
    Ho = (H + 2 * pad - kh) // stride + 1
    Wo = (W + 2 * pad - kw) // stride + 1
    T = np.zeros((Cin, H, W, Cout, Ho, Wo), dtype=np.float32)
    for ho in range(Ho):
        for wo in range(Wo):
            for i in range(kh):
                for j in range(kw):
                    hi = ho * stride - pad + i
                    wi = wo * stride - pad + j
                    if 0 <= hi < H and 0 <= wi < W:
                        T[:, hi, wi, :, ho, wo] += w[:, :, i, j].T  # (Cin, Cout)
    T = T.reshape(Cin * H * W, Cout * Ho * Wo)
    b_vec = np.repeat(bias.astype(np.float32), Ho * Wo)  # channel-major flatten
    return T, b_vec, Ho, Wo


# --------------------------------------------------------------------------
# Fused Pallas kernel: x -> relu(x@W0+b0) -> relu(...@W1+b1) -> ... -> @Wf+bf
# --------------------------------------------------------------------------
def _fused_kernel(x_ref, *refs, relu_flags):
    """refs = (w0, b0, w1, b1, ..., o_ref)."""
    o_ref = refs[-1]
    # Cast the f32 input to bf16 once, inside the kernel (halves input HBM
    # traffic vs a wrapper-side astype that materializes a second copy of x).
    h = x_ref[...].astype(jnp.bfloat16)                # (tb, K0) bf16
    n_layers = len(relu_flags)
    for l in range(n_layers):
        w = refs[2 * l][...]                           # bf16 (K_l, N_l), N_l % 128 == 0
        b = refs[2 * l + 1][...]                       # f32  (1, N_l)
        y = jnp.dot(h, w, preferred_element_type=jnp.float32) + b
        if relu_flags[l]:
            y = jnp.maximum(y, 0.0)                    # epilogue stays f32
        if l + 1 < n_layers:
            h = y.astype(jnp.bfloat16)                 # bf16 into the next MXU pass
        else:
            o_ref[...] = y.astype(o_ref.dtype)


def _pick_batch_tile(B, batch_tile, n_cores):
    if B <= 16 or (B <= batch_tile and n_cores < 2):
        return B                                       # single full-extent block
    if B <= batch_tile:                                # v7x: split so both TCs work
        return _round_up(pl.cdiv(B, n_cores), 8)
    n_blocks = max(pl.cdiv(B, batch_tile), n_cores)
    return _round_up(pl.cdiv(B, n_blocks), 8)


def fused_forward(x_flat, mats, biases, relu_flags, *, batch_tile=None):
    """x_flat: (B, K0) f32 (K0 % 128 == 0 after prep);
    mats[l]: (K_l, N_l) bf16 (N_l % 128 == 0); biases[l]: (1, N_l) f32."""
    B, K0 = x_flat.shape
    N_last = mats[-1].shape[1]
    if batch_tile is None:
        batch_tile = _default_batch_tile()
    n_cores = _num_parallel_cores()

    tb = _pick_batch_tile(B, batch_tile, n_cores)
    b_pad = _round_up(B, tb)
    if b_pad != B:                                     # ragged batch: zero-pad rows
        x_flat = jnp.pad(x_flat, ((0, b_pad - B), (0, 0)))
    grid = (b_pad // tb,)

    # x / out batch tiles are pipelined (double-buffered); the constant
    # weights & biases live whole in VMEM for the entire kernel: one resident
    # copy, no per-step DMA, no double-buffering of never-changing blocks.
    const_spec = pl.BlockSpec(memory_space=pltpu.MemorySpace.VMEM)
    in_specs = [pl.BlockSpec((tb, K0), lambda i: (i, 0))]
    operands = [x_flat]
    for w, b in zip(mats, biases):
        in_specs += [const_spec, const_spec]
        operands += [w, b]

    # Explicit VMEM budget from the packed footprint (scoped defaults are only
    # 16/32 MiB on v5e / v6e+v7x). Capped at 64 MiB (v7x physical).
    vmem = 2 * tb * K0 * 4 + 2 * tb * N_last * 4                       # x / out tiles
    vmem += sum(int(w.size) * 2 + int(b.size) * 4
                for w, b in zip(mats, biases))                         # resident consts
    vmem += sum(tb * int(w.shape[1]) * 6 for w in mats)                # f32 act + bf16 cast
    vmem_limit = max(32 << 20, min(2 * vmem + (4 << 20), 64 << 20))

    out = pl.pallas_call(
        functools.partial(_fused_kernel, relu_flags=tuple(relu_flags)),
        out_shape=jax.ShapeDtypeStruct((b_pad, N_last), jnp.float32),
        grid=grid,
        in_specs=in_specs,
        out_specs=pl.BlockSpec((tb, N_last), lambda i: (i, 0)),
        compiler_params=pltpu.CompilerParams(
            dimension_semantics=("parallel",),
            vmem_limit_bytes=int(vmem_limit)),
    )(*operands)
    return out[:B] if b_pad != B else out


# --------------------------------------------------------------------------
# ConvNet (mirrors the PyTorch module semantics, incl. the [idx - 1] indexing)
# --------------------------------------------------------------------------
class ConvNetPallas:
    def __init__(self, key, input_size, output_size, n_channels, kernel_sizes,
                 strides, paddings, activation="relu", last_fc_layer=True):
        assert activation == "relu"
        self.last_fc_layer = last_fc_layer
        self.output_size = output_size
        self.conv_params = []   # (w (Cout,Cin,k,k), b (Cout,), stride, pad) as numpy
        for idx in range(len(n_channels)):
            in_size = input_size if idx == 0 else n_channels[idx - 1]
            out_size = n_channels[idx]
            # NOTE: intentionally reproduces the PyTorch module's [idx - 1]
            # indexing quirk: layer 0 uses the LAST entries of these lists.
            # Do NOT "fix" without breaking parity with the reference module.
            k = kernel_sizes[idx - 1]
            s = strides[idx - 1]
            p = paddings[idx - 1]
            key, wk, bk = jax.random.split(key, 3)
            fan_in = in_size * k * k
            bound = 1.0 / (fan_in ** 0.5)
            w = jax.random.uniform(wk, (out_size, in_size, k, k), jnp.float32,
                                   -bound, bound)
            b = jax.random.uniform(bk, (out_size,), jnp.float32, -bound, bound)
            self.conv_params.append((np.asarray(w), np.asarray(b), s, p))
        if last_fc_layer:
            key, wk, bk = jax.random.split(key, 3)
            bound = 1.0 / (n_channels[-1] ** 0.5)
            self.fc_w = np.asarray(jax.random.uniform(
                wk, (output_size, n_channels[-1]), jnp.float32, -bound, bound))
            self.fc_b = np.asarray(jax.random.uniform(
                bk, (output_size,), jnp.float32, -bound, bound))
        self._packed = None
        self._packed_key = None

    # One-time (per input spatial size) weight packing: dense transfer
    # matrices, lane padding of K0 and every N to 128, bf16 cast. Nothing here
    # runs per call. NOTE: keyed only on (H, W) — weights are frozen after
    # __init__ (inference); re-key if this ever becomes trainable.
    def _prepare(self, H, W):
        mats, biases, relu_flags = [], [], []
        h_sp, w_sp = H, W
        c_in = self.conv_params[0][0].shape[1]
        k_in = c_in * H * W
        prev_n, prev_npad = k_in, _round_up(k_in, _LANE)   # lane-pad the input width
        self._k_in, self._k_in_pad = k_in, prev_npad
        c_last = None
        for (cw, cb, s, p) in self.conv_params:
            T, bvec, ho, wo = _conv_as_dense(cw, cb, h_sp, w_sp, s, p)
            # Match K to the (lane-padded) width of the previous layer / input.
            if prev_npad != prev_n:
                T = np.pad(T, ((0, prev_npad - prev_n), (0, 0)))
            n = T.shape[1]
            npad = _round_up(n, _LANE)
            T = np.pad(T, ((0, 0), (0, npad - n)))
            bvec = np.pad(bvec, (0, npad - n))
            mats.append(jnp.asarray(T, jnp.bfloat16))
            biases.append(jnp.asarray(bvec.reshape(1, -1), jnp.float32))
            relu_flags.append(True)
            prev_n, prev_npad = n, npad
            h_sp, w_sp = ho, wo
            c_last = cw.shape[0]
        if self.last_fc_layer:
            # torch: x.squeeze() then Linear(n_channels[-1], out) -> the conv
            # stack must end at 1x1 spatial.
            assert h_sp == 1 and w_sp == 1, "final FC requires 1x1 spatial output"
            n_out_pad = _round_up(self.output_size, _LANE)
            Wf = np.zeros((prev_npad, n_out_pad), np.float32)
            Wf[:prev_n, :self.output_size] = self.fc_w.T
            bf = np.zeros((1, n_out_pad), np.float32)
            bf[0, :self.output_size] = self.fc_b
            mats.append(jnp.asarray(Wf, jnp.bfloat16))
            biases.append(jnp.asarray(bf, jnp.float32))
            relu_flags.append(False)
        self._packed = (tuple(mats), tuple(biases), tuple(relu_flags),
                        (h_sp, w_sp, c_last, prev_n))
        self._packed_key = (H, W)

    def __call__(self, x):
        B, C, H, W = x.shape
        if self._packed_key != (H, W):
            self._prepare(H, W)
        mats, biases, relu_flags, (ho, wo, c_last, n_last) = self._packed

        # NCHW flatten is a pure reshape; x stays f32 (single HBM read —
        # the bf16 cast happens inside the kernel).
        x_flat = x.reshape(B, C * H * W).astype(jnp.float32)
        if self._k_in_pad != self._k_in:   # lane-pad K0 when C*H*W % 128 != 0
            x_flat = jnp.pad(x_flat, ((0, 0), (0, self._k_in_pad - self._k_in)))

        y = fused_forward(x_flat, mats, biases, relu_flags)   # (B, N_pad) f32

        if self.last_fc_layer:
            # torch: squeeze + (unsqueeze if B==1) + fc  ==  fc on (B, C_last);
            # the kernel already did the fc, just drop the lane padding.
            return y[:, :self.output_size]
        # No final fc: restore NCHW conv output and apply torch's squeeze.
        y = y[:, :n_last].reshape(B, c_last, ho, wo)
        y = jnp.squeeze(y)
        if y.ndim == 1:
            y = y[None, :]
        return y


# --------------------------------------------------------------------------
# Pure-JAX reference (for correctness checking only)
# --------------------------------------------------------------------------
def reference_forward(net, x):
    for (w, b, s, p) in net.conv_params:
        x = jax.lax.conv_general_dilated(
            x, jnp.asarray(w), window_strides=(s, s), padding=[(p, p), (p, p)],
            dimension_numbers=("NCHW", "OIHW", "NCHW"))
        x = jnp.maximum(x + jnp.asarray(b)[None, :, None, None], 0.0)
    x = jnp.squeeze(x)
    if x.ndim == 1:
        x = x[None, :]
    if net.last_fc_layer:
        x = x @ jnp.asarray(net.fc_w).T + jnp.asarray(net.fc_b)
    return x


if __name__ == "__main__":
    key = jax.random.PRNGKey(0)
    pkey, xkey = jax.random.split(key)

    # Config: 2 conv layers collapse 8x8 spatial -> 1x1, then Linear(16, 10).
    # (With the module's [idx-1] indexing, layer 0 picks the LAST list entries:
    #  layer0 -> k=3, s=2, p=1 ; layer1 -> k=4, s=1, p=0.)
    input_size = 4
    output_size = 10
    n_channels = [8, 16]
    kernel_sizes = [4, 3]
    strides = [1, 2]
    paddings = [0, 1]

    net = ConvNetPallas(pkey, input_size, output_size, n_channels,
                        kernel_sizes, strides, paddings)

    x = jax.random.normal(xkey, (2, input_size, 8, 8), jnp.float32)

    out = jax.block_until_ready(net(x))
    ref = jax.block_until_ready(reference_forward(net, x))

    assert out.shape == (2, output_size), out.shape
    # bf16 MXU inputs with f32 accumulation -> slightly looser tolerance.
    assert jnp.allclose(out, ref, atol=5e-2, rtol=5e-2), "mismatch vs reference"

    print("KERNEL_OK")
</pallas_src>

<mosaic_0001>
module attributes {stable_mosaic.version = 11 : i64} {
  func.func @_fused_kernel(%arg0: i32, %arg1: memref<2x256xf32, #tpu.memory_space<vmem>>, %arg2: memref<256x128xbf16, #tpu.memory_space<vmem>>, %arg3: memref<1x128xf32, #tpu.memory_space<vmem>>, %arg4: memref<128x128xbf16, #tpu.memory_space<vmem>>, %arg5: memref<1x128xf32, #tpu.memory_space<vmem>>, %arg6: memref<128x128xbf16, #tpu.memory_space<vmem>>, %arg7: memref<1x128xf32, #tpu.memory_space<vmem>>, %arg8: memref<2x128xf32, #tpu.memory_space<vmem>>) attributes {dimension_semantics = [#tpu.dimension_semantics<parallel>], iteration_bounds = array<i64: 1>, scalar_prefetch = 0 : i64, scratch_operands = 0 : i64, tpu.core_type = #tpu.core_type<tc>, window_params = [{transform_indices = @transform_0, window_bounds = array<i64: 2, 256>}, {pipeline_mode = #tpu.pipeline_mode<synchronous>, transform_indices = @transform_1, window_bounds = array<i64: 256, 128>}, {pipeline_mode = #tpu.pipeline_mode<synchronous>, transform_indices = @transform_2, window_bounds = array<i64: 1, 128>}, {pipeline_mode = #tpu.pipeline_mode<synchronous>, transform_indices = @transform_3, window_bounds = array<i64: 128, 128>}, {pipeline_mode = #tpu.pipeline_mode<synchronous>, transform_indices = @transform_4, window_bounds = array<i64: 1, 128>}, {pipeline_mode = #tpu.pipeline_mode<synchronous>, transform_indices = @transform_5, window_bounds = array<i64: 128, 128>}, {pipeline_mode = #tpu.pipeline_mode<synchronous>, transform_indices = @transform_6, window_bounds = array<i64: 1, 128>}, {transform_indices = @transform_7, window_bounds = array<i64: 2, 128>}]} {
    %c0 = arith.constant 0 : index
    %c0_0 = arith.constant 0 : index
    %0 = vector.load %arg1[%c0, %c0_0] : memref<2x256xf32, #tpu.memory_space<vmem>>, vector<2x256xf32>
    %1 = arith.truncf %0 : vector<2x256xf32> to vector<2x256xbf16>
    %c0_1 = arith.constant 0 : index
    %c0_2 = arith.constant 0 : index
    %2 = vector.load %arg2[%c0_1, %c0_2] : memref<256x128xbf16, #tpu.memory_space<vmem>>, vector<256x128xbf16>
    %c0_3 = arith.constant 0 : index
    %c0_4 = arith.constant 0 : index
    %3 = vector.load %arg3[%c0_3, %c0_4] : memref<1x128xf32, #tpu.memory_space<vmem>>, vector<1x128xf32>
    %cst = arith.constant dense<0.000000e+00> : vector<2x128xf32>
    %4 = tpu.matmul %1, %2, %cst {dimension_numbers = #tpu.dot_dimension_numbers<[1], [0], [0], [1], [0, 0, 1, 1], [], []>} : vector<2x256xbf16>, vector<256x128xbf16>, vector<2x128xf32> -> vector<2x128xf32>
    %5 = vector.broadcast %3 : vector<1x128xf32> to vector<2x128xf32>
    %6 = arith.addf %4, %5 : vector<2x128xf32>
    %cst_5 = arith.constant 0.000000e+00 : f32
    %7 = vector.broadcast %cst_5 : f32 to vector<2x128xf32>
    %8 = arith.maximumf %6, %7 : vector<2x128xf32>
    %9 = arith.truncf %8 : vector<2x128xf32> to vector<2x128xbf16>
    %c0_6 = arith.constant 0 : index
    %c0_7 = arith.constant 0 : index
    %10 = vector.load %arg4[%c0_6, %c0_7] : memref<128x128xbf16, #tpu.memory_space<vmem>>, vector<128x128xbf16>
    %c0_8 = arith.constant 0 : index
    %c0_9 = arith.constant 0 : index
    %11 = vector.load %arg5[%c0_8, %c0_9] : memref<1x128xf32, #tpu.memory_space<vmem>>, vector<1x128xf32>
    %cst_10 = arith.constant dense<0.000000e+00> : vector<2x128xf32>
    %12 = tpu.matmul %9, %10, %cst_10 {dimension_numbers = #tpu.dot_dimension_numbers<[1], [0], [0], [1], [0, 0, 1, 1], [], []>} : vector<2x128xbf16>, vector<128x128xbf16>, vector<2x128xf32> -> vector<2x128xf32>
    %13 = vector.broadcast %11 : vector<1x128xf32> to vector<2x128xf32>
    %14 = arith.addf %12, %13 : vector<2x128xf32>
    %cst_11 = arith.constant 0.000000e+00 : f32
    %15 = vector.broadcast %cst_11 : f32 to vector<2x128xf32>
    %16 = arith.maximumf %14, %15 : vector<2x128xf32>
    %17 = arith.truncf %16 : vector<2x128xf32> to vector<2x128xbf16>
    %c0_12 = arith.constant 0 : index
    %c0_13 = arith.constant 0 : index
    %18 = vector.load %arg6[%c0_12, %c0_13] : memref<128x128xbf16, #tpu.memory_space<vmem>>, vector<128x128xbf16>
    %c0_14 = arith.constant 0 : index
    %c0_15 = arith.constant 0 : index
    %19 = vector.load %arg7[%c0_14, %c0_15] : memref<1x128xf32, #tpu.memory_space<vmem>>, vector<1x128xf32>
    %cst_16 = arith.constant dense<0.000000e+00> : vector<2x128xf32>
    %20 = tpu.matmul %17, %18, %cst_16 {dimension_numbers = #tpu.dot_dimension_numbers<[1], [0], [0], [1], [0, 0, 1, 1], [], []>} : vector<2x128xbf16>, vector<128x128xbf16>, vector<2x128xf32> -> vector<2x128xf32>
    %21 = vector.broadcast %19 : vector<1x128xf32> to vector<2x128xf32>
    %22 = arith.addf %20, %21 : vector<2x128xf32>
    %c0_17 = arith.constant 0 : index
    %c0_18 = arith.constant 0 : index
    %23 = vector.load %arg8[%c0_17, %c0_18] : memref<2x128xf32, #tpu.memory_space<vmem>>, vector<2x128xf32>
    tpu.vector_store %arg8[%c0_17, %c0_18], %22 {strides = array<i32>} : memref<2x128xf32, #tpu.memory_space<vmem>>, vector<2x128xf32>,
    return
  }
  func.func @transform_0(%arg0: i32) -> (i32, i32) {
    %c0_i32 = arith.constant 0 : i32
    %c0_i32_0 = arith.constant 0 : i32
    return %arg0, %c0_i32 : i32, i32
  }
  func.func @transform_1(%arg0: i32) -> (i32, i32) {
    %c0_i32 = arith.constant 0 : i32
    %c0_i32_0 = arith.constant 0 : i32
    %c0_i32_1 = arith.constant 0 : i32
    return %c0_i32, %c0_i32_0 : i32, i32
  }
  func.func @transform_2(%arg0: i32) -> (i32, i32) {
    %c0_i32 = arith.constant 0 : i32
    %c0_i32_0 = arith.constant 0 : i32
    %c0_i32_1 = arith.constant 0 : i32
    return %c0_i32, %c0_i32_0 : i32, i32
  }
  func.func @transform_3(%arg0: i32) -> (i32, i32) {
    %c0_i32 = arith.constant 0 : i32
    %c0_i32_0 = arith.constant 0 : i32
    %c0_i32_1 = arith.constant 0 : i32
    return %c0_i32, %c0_i32_0 : i32, i32
  }
  func.func @transform_4(%arg0: i32) -> (i32, i32) {
    %c0_i32 = arith.constant 0 : i32
    %c0_i32_0 = arith.constant 0 : i32
    %c0_i32_1 = arith.constant 0 : i32
    return %c0_i32, %c0_i32_0 : i32, i32
  }
  func.func @transform_5(%arg0: i32) -> (i32, i32) {
    %c0_i32 = arith.constant 0 : i32
    %c0_i32_0 = arith.constant 0 : i32
    %c0_i32_1 = arith.constant 0 : i32
    return %c0_i32, %c0_i32_0 : i32, i32
  }
  func.func @transform_6(%arg0: i32) -> (i32, i32) {
    %c0_i32 = arith.constant 0 : i32
    %c0_i32_0 = arith.constant 0 : i32
    %c0_i32_1 = arith.constant 0 : i32
    return %c0_i32, %c0_i32_0 : i32, i32
  }
  func.func @transform_7(%arg0: i32) -> (i32, i32) {
    %c0_i32 = arith.constant 0 : i32
    %c0_i32_0 = arith.constant 0 : i32
    return %arg0, %c0_i32 : i32, i32
  }
}

</mosaic_0001>

<llo_original>
// kernel: tpu_custom_call.1
$region0: #{tpu_custom_call.1}
  #allocation0 [shape = 'u32[]', space=smem, size = 0x4, offset = 0x4, fixed_abs, tag = 'smem constant byte address 0x4 - core index']
  #allocation1 [shape = 'u32[72,128]{1,0:T(1,128)}', space=vmem, size = 0x9000, scoped, tag = 'internal scratch']
  %s0 = inlined_call_operand.hbm [shape: f32[2,256], index: 0, kind: input, shape index: {}]
  %s1 = inlined_call_operand.hbm [shape: bf16[256,128], index: 1, kind: input, shape index: {}]
  %s2 = inlined_call_operand.vmem [shape: f32[1,128], index: 2, kind: input, shape index: {}]
  %s3 = inlined_call_operand.hbm [shape: bf16[128,128], index: 3, kind: input, shape index: {}]
  %s4 = inlined_call_operand.vmem [shape: f32[1,128], index: 4, kind: input, shape index: {}]
  %s5 = inlined_call_operand.hbm [shape: bf16[128,128], index: 5, kind: input, shape index: {}]
  %s6 = inlined_call_operand.vmem [shape: f32[1,128], index: 6, kind: input, shape index: {}]
  %s7 = inlined_call_operand.hbm [shape: f32[2,128], index: 7, kind: output, shape index: {}]
  %s8 = sld [smem:[#allocation0]]
  $region54: #{tpu_custom_call.1} parent=0
    _
  %s10 = ssub.s32 1, %s8
  %s11 = scalar_select 0, %s10, %s8
  $region1: #{tpu_custom_call.1} parent=0
    #allocation2 [shape = 'u8[2048]{0}', space=vmem, size = 0x800, scoped, tag = 'input window, operand 0, single buffered']
    #allocation3 [shape = 's32[1]{0}', space=sflag, size = 0x4, scoped, tag = 'scoped memory for tpu_custom_call.1']
    #allocation4 [shape = 's32[1]{0}', space=sflag, size = 0x4, scoped, tag = 'scoped memory for tpu_custom_call.1']
    #allocation5 [shape = 'u8[65536]{0}', space=vmem, size = 0x10000, scoped, tag = 'input window, operand 1, single buffered']
    #allocation6 [shape = 's32[1]{0}', space=sflag, size = 0x4, scoped, tag = 'scoped memory for tpu_custom_call.1']
    #allocation7 [shape = 'u8[32768]{0}', space=vmem, size = 0x8000, scoped, tag = 'input window, operand 3, single buffered']
    #allocation8 [shape = 'u8[32768]{0}', space=vmem, size = 0x8000, scoped, tag = 'input window, operand 5, single buffered']
    #allocation9 [shape = 's32[1]{0}', space=sflag, size = 0x4, scoped, tag = 'scoped memory for tpu_custom_call.1']
    #allocation10 [shape = 'u8[1024]{0}', space=vmem, size = 0x400, scoped, tag = 'output window, operand 0, single buffered']
    %12 = vsyncpa [#allocation3], 0
    %13 = vsyncpa [#allocation6], 0
    %14 = vsyncpa [#allocation9], 0
    %15 = vsyncpa [#allocation4], 0
    // Predicated region
    $region2: #{tpu_custom_call.1} parent=1 // pred_check
      _
    $region3: #{tpu_custom_call.1} parent=1 // pred_check_branch
      %17 = sbr.rel (0) target = $region5
    $region4: #{tpu_custom_call.1} parent=1 // pred_region
      %19 = vsyncadd [#allocation3], 0
      %s21 = sshll.u32 %s0, 4
      %s22 = int_to_ptr.hbm [resolvable:$true] %s21
      %s23 = sshll.u32 [#allocation2], 4
      %s24 = int_to_ptr.vmem [resolvable:$true] %s23
      %26 = dma.hbm_to_vmem [thread:$0]  %s22, 64, %s24, [#allocation3]
    $region5: #{tpu_custom_call.1} parent=1 // pred_fallthru
      _
    // Predicated region
    $region6: #{tpu_custom_call.1} parent=1 // pred_check
      _
    $region7: #{tpu_custom_call.1} parent=1 // pred_check_branch
      %28 = sbr.rel (0) target = $region9
    $region8: #{tpu_custom_call.1} parent=1 // pred_region
      %30 = vsyncadd [#allocation6], 0
      %s31 = sshll.u32 %s1, 4
      %s32 = int_to_ptr.hbm [resolvable:$true] %s31
      %s33 = sshll.u32 [#allocation5], 4
      %s34 = int_to_ptr.vmem [resolvable:$true] %s33
      %39 = dma.hbm_to_vmem [thread:$0]  %s32, 2048, %s34, [#allocation6], 64, 64, 4
    $region9: #{tpu_custom_call.1} parent=1 // pred_fallthru
      _
    // Predicated region
    $region10: #{tpu_custom_call.1} parent=1 // pred_check
      _
    $region11: #{tpu_custom_call.1} parent=1 // pred_check_branch
      %41 = sbr.rel (0) target = $region13
    $region12: #{tpu_custom_call.1} parent=1 // pred_region
      _
    $region13: #{tpu_custom_call.1} parent=1 // pred_fallthru
      _
    // Predicated region
    $region14: #{tpu_custom_call.1} parent=1 // pred_check
      _
    $region15: #{tpu_custom_call.1} parent=1 // pred_check_branch
      %43 = sbr.rel (0) target = $region17
    $region16: #{tpu_custom_call.1} parent=1 // pred_region
      %45 = vsyncadd [#allocation6], 0
      %s46 = sshll.u32 %s3, 4
      %s47 = int_to_ptr.hbm [resolvable:$true] %s46
      %s48 = sshll.u32 [#allocation7], 4
      %s49 = int_to_ptr.vmem [resolvable:$true] %s48
      %54 = dma.hbm_to_vmem [thread:$0]  %s47, 1024, %s49, [#allocation6], 64, 64, 4
    $region17: #{tpu_custom_call.1} parent=1 // pred_fallthru
      _
    // Predicated region
    $region18: #{tpu_custom_call.1} parent=1 // pred_check
      _
    $region19: #{tpu_custom_call.1} parent=1 // pred_check_branch
      %56 = sbr.rel (0) target = $region21
    $region20: #{tpu_custom_call.1} parent=1 // pred_region
      _
    $region21: #{tpu_custom_call.1} parent=1 // pred_fallthru
      _
    // Predicated region
    $region22: #{tpu_custom_call.1} parent=1 // pred_check
      _
    $region23: #{tpu_custom_call.1} parent=1 // pred_check_branch
      %58 = sbr.rel (0) target = $region25
    $region24: #{tpu_custom_call.1} parent=1 // pred_region
      %60 = vsyncadd [#allocation9], 0
      %s61 = sshll.u32 %s5, 4
      %s62 = int_to_ptr.hbm [resolvable:$true] %s61
      %s63 = sshll.u32 [#allocation8], 4
      %s64 = int_to_ptr.vmem [resolvable:$true] %s63
      %69 = dma.hbm_to_vmem [thread:$0]  %s62, 1024, %s64, [#allocation9], 64, 64, 4
    $region25: #{tpu_custom_call.1} parent=1 // pred_fallthru
      _
    // Predicated region
    $region26: #{tpu_custom_call.1} parent=1 // pred_check
      _
    $region27: #{tpu_custom_call.1} parent=1 // pred_check_branch
      %71 = sbr.rel (0) target = $region29
    $region28: #{tpu_custom_call.1} parent=1 // pred_region
      _
    $region29: #{tpu_custom_call.1} parent=1 // pred_fallthru
      _
    // Predicated region
    $region30: #{tpu_custom_call.1} parent=1 // pred_check
      _
    $region31: #{tpu_custom_call.1} parent=1 // pred_check_branch
      %73 = sbr.rel (0) target = $region33
    $region32: #{tpu_custom_call.1} parent=1 // pred_region
      %75 = dma.done [#allocation3], 64
    $region33: #{tpu_custom_call.1} parent=1 // pred_fallthru
      _
    // Predicated region
    $region34: #{tpu_custom_call.1} parent=1 // pred_check
      _
    $region35: #{tpu_custom_call.1} parent=1 // pred_check_branch
      %77 = sbr.rel (0) target = $region37
    $region36: #{tpu_custom_call.1} parent=1 // pred_region
      %79 = dma.done [#allocation6], 2048
    $region37: #{tpu_custom_call.1} parent=1 // pred_fallthru
      _
    // Predicated region
    $region38: #{tpu_custom_call.1} parent=1 // pred_check
      _
    $region39: #{tpu_custom_call.1} parent=1 // pred_check_branch
      %81 = sbr.rel (0) target = $region41
    $region40: #{tpu_custom_call.1} parent=1 // pred_region
      %83 = dma.done [#allocation6], 1024
    $region41: #{tpu_custom_call.1} parent=1 // pred_fallthru
      _
    // Predicated region
    $region42: #{tpu_custom_call.1} parent=1 // pred_check
      _
    $region43: #{tpu_custom_call.1} parent=1 // pred_check_branch
      %85 = sbr.rel (0) target = $region45
    $region44: #{tpu_custom_call.1} parent=1 // pred_region
      %87 = dma.done [#allocation9], 1024
    $region45: #{tpu_custom_call.1} parent=1 // pred_fallthru
      _
    %v88 = vld [vmem:[#allocation2] sm:$0xf]
    %90 = vst [vmem:[#allocation1] ss:$4 sm:$0xff] %v88
    %v91 = vld.sshfl [vmem:[#allocation1] sm:$0xff pattern:$0x73625140]
    %v92 = vld.sshfl [vmem:[#allocation1 + $0x8] sm:$0xff pattern:$0x73625140]
    %v95 = vpack.c.bf16 %v91, %v91
    %v96 = vpack.c.bf16 %v92, %v92
    %v97 = vld [vmem:[#allocation5] sm:$0xf]
    %v98 = vld [vmem:[#allocation5 + $0x4] sm:$0xf]
    %v99 = vld [vmem:[#allocation5 + $0x8] sm:$0xf]
    %v100 = vld [vmem:[#allocation5 + $0xc] sm:$0xf]
    %v101 = vld [vmem:[#allocation5 + $0x10] sm:$0xf]
    %v102 = vld [vmem:[#allocation5 + $0x14] sm:$0xf]
    %v103 = vld [vmem:[#allocation5 + $0x18] sm:$0xf]
    %v104 = vld [vmem:[#allocation5 + $0x1c] sm:$0xf]
    %v105 = vld [vmem:[#allocation5 + $0x20] sm:$0xf]
    %v106 = vld [vmem:[#allocation5 + $0x24] sm:$0xf]
    %v107 = vld [vmem:[#allocation5 + $0x28] sm:$0xf]
    %v108 = vld [vmem:[#allocation5 + $0x2c] sm:$0xf]
    %v109 = vld [vmem:[#allocation5 + $0x30] sm:$0xf]
    %v110 = vld [vmem:[#allocation5 + $0x34] sm:$0xf]
    %v111 = vld [vmem:[#allocation5 + $0x38] sm:$0xf]
    %v112 = vld [vmem:[#allocation5 + $0x3c] sm:$0xf]
    %v113 = vld [vmem:[#allocation5 + $0x40] sm:$0xf]
    %v114 = vld [vmem:[#allocation5 + $0x44] sm:$0xf]
    %v115 = vld [vmem:[#allocation5 + $0x48] sm:$0xf]
    %v116 = vld [vmem:[#allocation5 + $0x4c] sm:$0xf]
    %v117 = vld [vmem:[#allocation5 + $0x50] sm:$0xf]
    %v118 = vld [vmem:[#allocation5 + $0x54] sm:$0xf]
    %v119 = vld [vmem:[#allocation5 + $0x58] sm:$0xf]
    %v120 = vld [vmem:[#allocation5 + $0x5c] sm:$0xf]
    %v121 = vld [vmem:[#allocation5 + $0x60] sm:$0xf]
    %v122 = vld [vmem:[#allocation5 + $0x64] sm:$0xf]
    %v123 = vld [vmem:[#allocation5 + $0x68] sm:$0xf]
    %v124 = vld [vmem:[#allocation5 + $0x6c] sm:$0xf]
    %v125 = vld [vmem:[#allocation5 + $0x70] sm:$0xf]
    %v126 = vld [vmem:[#allocation5 + $0x74] sm:$0xf]
    %v127 = vld [vmem:[#allocation5 + $0x78] sm:$0xf]
    %v128 = vld [vmem:[#allocation5 + $0x7c] sm:$0xf]
    %v129 = vld [vmem:[%s2] sm:$0x1]
    %v131 = vperm.slane %v129, 0
    %v165 = vunpack.c.l.b16 %v97
    %v166 = vunpack.c.l.b16 %v98
    %v167 = vunpack.c.l.b16 %v99
    %v168 = vunpack.c.l.b16 %v100
    %v169 = vunpack.c.l.b16 %v101
    %v170 = vunpack.c.l.b16 %v102
    %v171 = vunpack.c.l.b16 %v103
    %v172 = vunpack.c.l.b16 %v104
    %v173 = vunpack.c.l.b16 %v105
    %v174 = vunpack.c.l.b16 %v106
    %v175 = vunpack.c.l.b16 %v107
    %v176 = vunpack.c.l.b16 %v108
    %v177 = vunpack.c.l.b16 %v109
    %v178 = vunpack.c.l.b16 %v110
    %v179 = vunpack.c.l.b16 %v111
    %v180 = vunpack.c.l.b16 %v112
    %v181 = vunpack.c.l.b16 %v113
    %v182 = vunpack.c.l.b16 %v114
    %v183 = vunpack.c.l.b16 %v115
    %v184 = vunpack.c.l.b16 %v116
    %v185 = vunpack.c.l.b16 %v117
    %v186 = vunpack.c.l.b16 %v118
    %v187 = vunpack.c.l.b16 %v119
    %v188 = vunpack.c.l.b16 %v120
    %v189 = vunpack.c.l.b16 %v121
    %v190 = vunpack.c.l.b16 %v122
    %v191 = vunpack.c.l.b16 %v123
    %v192 = vunpack.c.l.b16 %v124
    %v193 = vunpack.c.l.b16 %v125
    %v194 = vunpack.c.l.b16 %v126
    %v195 = vunpack.c.l.b16 %v127
    %v196 = vunpack.c.l.b16 %v128
    %v197 = vpack.c.b16 %v166, %v165
    %v198 = vpack.c.b16 %v168, %v167
    %v199 = vpack.c.b16 %v170, %v169
    %v200 = vpack.c.b16 %v172, %v171
    %v201 = vpack.c.b16 %v174, %v173
    %v202 = vpack.c.b16 %v176, %v175
    %v203 = vpack.c.b16 %v178, %v177
    %v204 = vpack.c.b16 %v180, %v179
    %v205 = vpack.c.b16 %v182, %v181
    %v206 = vpack.c.b16 %v184, %v183
    %v207 = vpack.c.b16 %v186, %v185
    %v208 = vpack.c.b16 %v188, %v187
    %v209 = vpack.c.b16 %v190, %v189
    %v210 = vpack.c.b16 %v192, %v191
    %v211 = vpack.c.b16 %v194, %v193
    %v212 = vpack.c.b16 %v196, %v195
    %229 = vmatpush.bf16.msra.mxu0 %v204
    %230 = vmatpush.bf16.msra.mxu0 %v203
    %231 = vmatpush.bf16.msra.mxu0 %v202
    %232 = vmatpush.bf16.msra.mxu0 %v201
    %233 = vmatpush.bf16.msra.mxu0 %v200
    %234 = vmatpush.bf16.msra.mxu0 %v199
    %235 = vmatpush.bf16.msra.mxu0 %v198
    %236 = vmatpush.bf16.msra.mxu0 %v197
    %237 = vmatmul.bf16.gmra.mxu0 %v95
    %v238 = vpop.f32.mrf.mxu0
    %v239 = vadd.f32 %v131, %v238
    %v240 = vpop.f32.mrf.mxu0
    %241 = vdwg.mxu0
    %242 = vmatpush.bf16.msra.mxu0 %v212
    %243 = vmatpush.bf16.msra.mxu0 %v211
    %244 = vmatpush.bf16.msra.mxu0 %v210
    %245 = vmatpush.bf16.msra.mxu0 %v209
    %246 = vmatpush.bf16.msra.mxu0 %v208
    %247 = vmatpush.bf16.msra.mxu0 %v207
    %248 = vmatpush.bf16.msra.mxu0 %v206
    %249 = vmatpush.bf16.msra.mxu0 %v205
    %250 = vmatmul.bf16.gmra.mxu0 %v96
    %v251 = vpop.f32.mrf.mxu0
    %v252 = vadd.f32 %v239, %v251
    %v253 = vpop.f32.mrf.mxu0
    %254 = vdwg.mxu0
    %v255 = vmax.f32 %v252, 0.0
    %v256 = vpack.c.bf16 %v255, %v255
    %v257 = vld [vmem:[#allocation7] sm:$0xf]
    %v258 = vld [vmem:[#allocation7 + $0x4] sm:$0xf]
    %v259 = vld [vmem:[#allocation7 + $0x8] sm:$0xf]
    %v260 = vld [vmem:[#allocation7 + $0xc] sm:$0xf]
    %v261 = vld [vmem:[#allocation7 + $0x10] sm:$0xf]
    %v262 = vld [vmem:[#allocation7 + $0x14] sm:$0xf]
    %v263 = vld [vmem:[#allocation7 + $0x18] sm:$0xf]
    %v264 = vld [vmem:[#allocation7 + $0x1c] sm:$0xf]
    %v265 = vld [vmem:[#allocation7 + $0x20] sm:$0xf]
    %v266 = vld [vmem:[#allocation7 + $0x24] sm:$0xf]
    %v267 = vld [vmem:[#allocation7 + $0x28] sm:$0xf]
    %v268 = vld [vmem:[#allocation7 + $0x2c] sm:$0xf]
    %v269 = vld [vmem:[#allocation7 + $0x30] sm:$0xf]
    %v270 = vld [vmem:[#allocation7 + $0x34] sm:$0xf]
    %v271 = vld [vmem:[#allocation7 + $0x38] sm:$0xf]
    %v272 = vld [vmem:[#allocation7 + $0x3c] sm:$0xf]
    %v273 = vld [vmem:[%s4] sm:$0x1]
    %v275 = vperm.slane %v273, 0
    %v293 = vunpack.c.l.b16 %v257
    %v294 = vunpack.c.l.b16 %v258
    %v295 = vunpack.c.l.b16 %v259
    %v296 = vunpack.c.l.b16 %v260
    %v297 = vunpack.c.l.b16 %v261
    %v298 = vunpack.c.l.b16 %v262
    %v299 = vunpack.c.l.b16 %v263
    %v300 = vunpack.c.l.b16 %v264
    %v301 = vunpack.c.l.b16 %v265
    %v302 = vunpack.c.l.b16 %v266
    %v303 = vunpack.c.l.b16 %v267
    %v304 = vunpack.c.l.b16 %v268
    %v305 = vunpack.c.l.b16 %v269
    %v306 = vunpack.c.l.b16 %v270
    %v307 = vunpack.c.l.b16 %v271
    %v308 = vunpack.c.l.b16 %v272
    %v309 = vpack.c.b16 %v294, %v293
    %v310 = vpack.c.b16 %v296, %v295
    %v311 = vpack.c.b16 %v298, %v297
    %v312 = vpack.c.b16 %v300, %v299
    %v313 = vpack.c.b16 %v302, %v301
    %v314 = vpack.c.b16 %v304, %v303
    %v315 = vpack.c.b16 %v306, %v305
    %v316 = vpack.c.b16 %v308, %v307
    %325 = vmatpush.bf16.msra.mxu0 %v316
    %326 = vmatpush.bf16.msra.mxu0 %v315
    %327 = vmatpush.bf16.msra.mxu0 %v314
    %328 = vmatpush.bf16.msra.mxu0 %v313
    %329 = vmatpush.bf16.msra.mxu0 %v312
    %330 = vmatpush.bf16.msra.mxu0 %v311
    %331 = vmatpush.bf16.msra.mxu0 %v310
    %332 = vmatpush.bf16.msra.mxu0 %v309
    %333 = vmatmul.bf16.gmra.mxu0 %v256
    %v334 = vpop.f32.mrf.mxu0
    %v335 = vadd.f32 %v275, %v334
    %v336 = vpop.f32.mrf.mxu0
    %337 = vdwg.mxu0
    %v338 = vmax.f32 %v335, 0.0
    %v339 = vpack.c.bf16 %v338, %v338
    %v340 = vld [vmem:[#allocation8] sm:$0xf]
    %v341 = vld [vmem:[#allocation8 + $0x4] sm:$0xf]
    %v342 = vld [vmem:[#allocation8 + $0x8] sm:$0xf]
    %v343 = vld [vmem:[#allocation8 + $0xc] sm:$0xf]
    %v344 = vld [vmem:[#allocation8 + $0x10] sm:$0xf]
    %v345 = vld [vmem:[#allocation8 + $0x14] sm:$0xf]
    %v346 = vld [vmem:[#allocation8 + $0x18] sm:$0xf]
    %v347 = vld [vmem:[#allocation8 + $0x1c] sm:$0xf]
    %v348 = vld [vmem:[#allocation8 + $0x20] sm:$0xf]
    %v349 = vld [vmem:[#allocation8 + $0x24] sm:$0xf]
    %v350 = vld [vmem:[#allocation8 + $0x28] sm:$0xf]
    %v351 = vld [vmem:[#allocation8 + $0x2c] sm:$0xf]
    %v352 = vld [vmem:[#allocation8 + $0x30] sm:$0xf]
    %v353 = vld [vmem:[#allocation8 + $0x34] sm:$0xf]
    %v354 = vld [vmem:[#allocation8 + $0x38] sm:$0xf]
    %v355 = vld [vmem:[#allocation8 + $0x3c] sm:$0xf]
    %v356 = vld [vmem:[%s6] sm:$0x1]
    %v358 = vperm.slane %v356, 0
    %v376 = vunpack.c.l.b16 %v340
    %v377 = vunpack.c.l.b16 %v341
    %v378 = vunpack.c.l.b16 %v342
    %v379 = vunpack.c.l.b16 %v343
    %v380 = vunpack.c.l.b16 %v344
    %v381 = vunpack.c.l.b16 %v345
    %v382 = vunpack.c.l.b16 %v346
    %v383 = vunpack.c.l.b16 %v347
    %v384 = vunpack.c.l.b16 %v348
    %v385 = vunpack.c.l.b16 %v349
    %v386 = vunpack.c.l.b16 %v350
    %v387 = vunpack.c.l.b16 %v351
    %v388 = vunpack.c.l.b16 %v352
    %v389 = vunpack.c.l.b16 %v353
    %v390 = vunpack.c.l.b16 %v354
    %v391 = vunpack.c.l.b16 %v355
    %v392 = vpack.c.b16 %v377, %v376
    %v393 = vpack.c.b16 %v379, %v378
    %v394 = vpack.c.b16 %v381, %v380
    %v395 = vpack.c.b16 %v383, %v382
    %v396 = vpack.c.b16 %v385, %v384
    %v397 = vpack.c.b16 %v387, %v386
    %v398 = vpack.c.b16 %v389, %v388
    %v399 = vpack.c.b16 %v391, %v390
    %408 = vmatpush.bf16.msra.mxu0 %v399
    %409 = vmatpush.bf16.msra.mxu0 %v398
    %410 = vmatpush.bf16.msra.mxu0 %v397
    %411 = vmatpush.bf16.msra.mxu0 %v396
    %412 = vmatpush.bf16.msra.mxu0 %v395
    %413 = vmatpush.bf16.msra.mxu0 %v394
    %414 = vmatpush.bf16.msra.mxu0 %v393
    %415 = vmatpush.bf16.msra.mxu0 %v392
    %416 = vmatmul.bf16.gmra.mxu0 %v339
    %v417 = vpop.f32.mrf.mxu0
    %v418 = vadd.f32 %v358, %v417
    %v419 = vpop.f32.mrf.mxu0
    %420 = vdwg.mxu0
    %421 = vst [vmem:[#allocation10] sm:$0x3] %v418
    // Predicated region
    $region46: #{tpu_custom_call.1} parent=1 // pred_check
      _
    $region47: #{tpu_custom_call.1} parent=1 // pred_check_branch
      %423 = sbr.rel (0) target = $region49
    $region48: #{tpu_custom_call.1} parent=1 // pred_region
      %425 = vsyncadd [#allocation4], 0
      %s427 = sshll.u32 [#allocation10], 4
      %s428 = int_to_ptr.vmem [resolvable:$true] %s427
      %s429 = sshll.u32 %s7, 4
      %s430 = int_to_ptr.hbm [resolvable:$true] %s429
      %432 = dma.vmem_to_hbm [thread:$0]  %s428, 32, %s430, [#allocation4]
    $region49: #{tpu_custom_call.1} parent=1 // pred_fallthru
      _
    // Predicated region
    $region50: #{tpu_custom_call.1} parent=1 // pred_check
      _
    $region51: #{tpu_custom_call.1} parent=1 // pred_check_branch
      %434 = sbr.rel (0) target = $region53
    $region52: #{tpu_custom_call.1} parent=1 // pred_region
      %436 = dma.done [#allocation4], 32
    $region53: #{tpu_custom_call.1} parent=1 // pred_fallthru
      _
    %437 = vsyncpa [#allocation3], 1
    %438 = vsyncpa [#allocation6], 1
    %439 = vsyncpa [#allocation9], 1
    %440 = vsyncpa [#allocation4], 1

</llo_original>
